<compile_context>
chip_gen: v6e
topology: v6e:2x2x1
jax: 0.10.0
libtpu: 0.0.40
codegen_flags: <defaults>
</compile_context>

<pallas_src>
import functools

import jax
import jax.numpy as jnp
from jax.experimental import pallas as pl
from jax.experimental.pallas import tpu as pltpu


def _round_up(x, m):
    return ((x + m - 1) // m) * m


def _pick_tile(dim, cap, align):
    """Tile size (multiple of `align`, <= ~cap) and padded extent for `dim`."""
    n_tiles = max(1, -(-dim // cap))
    tile = _round_up(-(-dim // n_tiles), align)
    return tile, n_tiles * tile


# ---------------------------------------------------------------------------
# Kernel 1: per-phase transposed GEMM  y[p] = W[p] @ A[p]  plus fused
# per-(phase, m-tile) BatchNorm channel sums.  Cout is on sublanes, the
# flattened spatial M axis is on lanes, and K = Cin * n_taps is one
# full-extent block (no reduction grid axis, no accumulator scratch).
def _gemm_stats_kernel(a_ref, w_ref, y_ref, sum_ref, sq_ref):
    y = jnp.dot(w_ref[...], a_ref[...], preferred_element_type=jnp.float32)
    y_ref[...] = y
    # Padded lanes (M), padded taps (K) and padded channels are exact zeros
    # (no in-kernel bias), so these partial sums need no masking.
    sum_ref[...] = jnp.sum(y, axis=1, keepdims=True)       # (Cout_pad, 1)
    sq_ref[...] = jnp.sum(y * y, axis=1, keepdims=True)    # (Cout_pad, 1)


def _gemm_with_stats(A, Wm, *, tm):
    """A: [P, K, M], Wm: [P, C, K]  ->  y: [P, C, M] + per-tile channel sums."""
    P, K, M = A.shape
    _, C, _ = Wm.shape
    n_m = M // tm
    return pl.pallas_call(
        _gemm_stats_kernel,
        out_shape=(
            jax.ShapeDtypeStruct((P, C, M), jnp.float32),
            jax.ShapeDtypeStruct((P, n_m, C, 1), jnp.float32),
            jax.ShapeDtypeStruct((P, n_m, C, 1), jnp.float32),
        ),
        grid_spec=pltpu.PrefetchScalarGridSpec(
            num_scalar_prefetch=0,
            grid=(P, n_m),
            in_specs=[
                pl.BlockSpec((None, K, tm), lambda pi, mi: (pi, 0, mi)),
                pl.BlockSpec((None, C, K), lambda pi, mi: (pi, 0, 0)),
            ],
            out_specs=[
                pl.BlockSpec((None, C, tm), lambda pi, mi: (pi, 0, mi)),
                pl.BlockSpec((None, None, C, 1), lambda pi, mi: (pi, mi, 0, 0)),
                pl.BlockSpec((None, None, C, 1), lambda pi, mi: (pi, mi, 0, 0)),
            ],
        ),
        compiler_params=pltpu.CompilerParams(
            dimension_semantics=("parallel", "parallel"),
            vmem_limit_bytes=32 * 1024 * 1024,
        ),
    )(A, Wm)


# ---------------------------------------------------------------------------
# Kernel 2: fused per-channel affine (BatchNorm) + ReLU, lane-dense and
# aliased in place onto y's HBM buffer.
def _bn_relu_kernel(y_ref, scale_ref, shift_ref, o_ref):
    o_ref[...] = jnp.maximum(y_ref[...] * scale_ref[...] + shift_ref[...], 0.0)


def _bn_relu(y, scale, shift, tm):
    P, C, M = y.shape
    # Grow the lane tile while it still divides M and stays ~<=2 MiB/block.
    tm2 = tm
    while (tm2 * 2 <= M and M % (tm2 * 2) == 0
           and C * tm2 * 2 * 4 <= 2 * 1024 * 1024):
        tm2 *= 2
    return pl.pallas_call(
        _bn_relu_kernel,
        out_shape=jax.ShapeDtypeStruct((P, C, M), jnp.float32),
        grid_spec=pltpu.PrefetchScalarGridSpec(
            num_scalar_prefetch=0,
            grid=(P, M // tm2),
            in_specs=[
                pl.BlockSpec((None, C, tm2), lambda pi, mi: (pi, 0, mi)),
                pl.BlockSpec((C, 1), lambda pi, mi: (0, 0)),
                pl.BlockSpec((C, 1), lambda pi, mi: (0, 0)),
            ],
            out_specs=pl.BlockSpec((None, C, tm2), lambda pi, mi: (pi, 0, mi)),
        ),
        compiler_params=pltpu.CompilerParams(
            dimension_semantics=("parallel", "parallel"),
            vmem_limit_bytes=32 * 1024 * 1024,
        ),
        input_output_aliases={0: 0},   # write back into y's HBM buffer
    )(y, scale, shift)


# ---------------------------------------------------------------------------
def conv3d_transpose_bn_relu(x, w, b, gamma, beta, *, stride, padding,
                             eps=1e-5, compute_dtype=jnp.float32):
    """ConvTranspose3d + BatchNorm3d (training-mode batch stats) + ReLU.

    x: [N, Cin, D, H, W]; w: [Cin, Cout, Kd, Kh, Kw] (PyTorch layouts).
    The ConvTranspose bias `b` cancels exactly under training-mode BatchNorm
    (it shifts the batch mean by the same per-channel constant), so it is not
    applied anywhere; the result is bit-for-bit the same function.  (If this
    module were ever evaluated with running/eval statistics, the bias would
    have to be re-introduced.)
    """
    del b
    N, Cin, D, H, W_in = x.shape
    Cin_w, Cout, Kd, Kh, Kw = w.shape
    assert Cin == Cin_w
    s, p = int(stride), int(padding)

    Do = (D - 1) * s - 2 * p + Kd
    Ho = (H - 1) * s - 2 * p + Kh
    Wo = (W_in - 1) * s - 2 * p + Kw
    assert Do > 0 and Ho > 0 and Wo > 0

    # ---- per-axis sub-pixel (phase) metadata ------------------------------
    # Output index o with o % s == o0 only receives kernel taps k = r + j*s
    # (r = (o0+p) % s) and reads input q0 + i - j  (q0 = (o0+p)//s, o = o0+s*i).
    def axis_meta(in_dim, out_dim, kk):
        metas, lo, hi = [], 0, 0
        for o0 in range(s):
            r = (o0 + p) % s
            q0 = (o0 + p) // s
            n_t = len(range(r, kk, s))          # taps of this phase
            o_r = len(range(o0, out_dim, s))    # valid outputs of this phase
            if n_t and o_r:
                lo = max(lo, (n_t - 1) - q0)
                hi = max(hi, q0 + o_r - 1 - (in_dim - 1))
            metas.append((r, q0, n_t, o_r))
        return metas, max(lo, 0), max(hi, 0)

    md, pdl, pdh = axis_meta(D, Do, Kd)
    mh, phl, phh = axis_meta(H, Ho, Kh)
    mw, pwl, pwh = axis_meta(W_in, Wo, Kw)

    Dm, Hm, Wm = -(-Do // s), -(-Ho // s), -(-Wo // s)           # ceil(out/s)
    nj_max = (-(-Kd // s)) * (-(-Kh // s)) * (-(-Kw // s))
    Pn = s * s * s

    k_align = 8 if jnp.dtype(compute_dtype).itemsize == 4 else 16
    K_pad = _round_up(max(Cin * nj_max, 1), k_align)
    Cout_pad = _round_up(Cout, 8)
    M0 = N * Dm * Hm * Wm
    # Keep the double-buffered A + y blocks comfortably inside 32 MiB VMEM.
    tm_cap = max(128, min(8192,
                          ((6 * 1024 * 1024) // (4 * (K_pad + Cout_pad)))
                          // 128 * 128))
    tm, M_pad = _pick_tile(M0, tm_cap, 128)

    # One global zero-pad of x covers every (phase, tap) window.
    xp = jnp.pad(x, ((0, 0), (0, 0), (pdl, pdh), (phl, phh), (pwl, pwh)))

    # ---- build per-phase operands directly in their GEMM layout -----------
    # A6[p, t*Cin+ci, n, i, j, k] = xp[n, ci, qd-jd+i, qh-jh+j, qw-jw+k]
    # (t row-major over taps); unwritten entries stay exact zeros.
    # TODO(synk): do this im2col gather inside the GEMM kernel (tap grid axis
    # + manual async_copy of shifted x windows) to avoid materializing A in
    # HBM at all; it remains XLA layout glue here.
    A6 = jnp.zeros((Pn, K_pad, N, Dm, Hm, Wm), compute_dtype)
    W_all = jnp.zeros((Pn, Cout_pad, K_pad), compute_dtype)

    pi = 0
    for od0 in range(s):                      # phases ordered by output offset
        rd, qd, nd, Do_r = md[od0]
        for oh0 in range(s):
            rh, qh, nh, Ho_r = mh[oh0]
            for ow0 in range(s):
                rw, qw, nw, Wo_r = mw[ow0]
                nj = nd * nh * nw
                if nj and Do_r and Ho_r and Wo_r:
                    wp = w[:, :, rd::s, rh::s, rw::s]      # [Cin,Cout,nd,nh,nw]
                    wp = wp.transpose(1, 2, 3, 4, 0).reshape(Cout, nj * Cin)
                    W_all = W_all.at[pi, :Cout, :nj * Cin].set(
                        wp.astype(compute_dtype))
                    t = 0
                    for jd in range(nd):
                        sd = qd + pdl - jd
                        for jh in range(nh):
                            sh = qh + phl - jh
                            for jw in range(nw):
                                sw = qw + pwl - jw
                                win = xp[:, :, sd:sd + Do_r, sh:sh + Ho_r,
                                         sw:sw + Wo_r]
                                win = win.transpose(1, 0, 2, 3, 4)  # [Cin,N,..]
                                A6 = A6.at[pi, t * Cin:(t + 1) * Cin, :,
                                           :Do_r, :Ho_r, :Wo_r].set(
                                    win.astype(compute_dtype))
                                t += 1
                pi += 1

    A_all = A6.reshape(Pn, K_pad, M0)
    if M_pad != M0:
        A_all = jnp.pad(A_all, ((0, 0), (0, 0), (0, M_pad - M0)))

    # ---- kernel 1: all phases in one pallas_call ---------------------------
    y_all, sums, sqs = _gemm_with_stats(A_all, W_all, tm=tm)

    # ---- BatchNorm (training-mode batch statistics) -> scale / shift -------
    M_total = N * Do * Ho * Wo
    total_sum = sums.sum(axis=(0, 1))[:, 0]
    total_sq = sqs.sum(axis=(0, 1))[:, 0]
    mean = total_sum / M_total
    var = jnp.maximum(total_sq / M_total - mean * mean, 0.0)
    # TODO(synk): single-pass E[x^2]-E[x]^2 variance in f32; use a centered
    # second pass if activations ever have |mean| >> std (and before enabling
    # bf16 operands by default).
    gamma_p = jnp.zeros((Cout_pad,), jnp.float32).at[:Cout].set(
        gamma.astype(jnp.float32))
    beta_p = jnp.zeros((Cout_pad,), jnp.float32).at[:Cout].set(
        beta.astype(jnp.float32))
    inv = jax.lax.rsqrt(var + eps)
    scale = (gamma_p * inv)[:, None]                       # (Cout_pad, 1)
    shift = (beta_p - mean * gamma_p * inv)[:, None]       # (Cout_pad, 1)

    # ---- kernel 2: fused BN affine + ReLU (aliased onto y_all) -------------
    o_all = _bn_relu(y_all, scale, shift, tm)

    # ---- single transpose interleaves the s^3 phases straight into NCDHW ---
    o8 = o_all[:, :Cout, :M0].reshape(s, s, s, Cout, N, Dm, Hm, Wm)
    o8 = o8.transpose(4, 3, 5, 0, 6, 1, 7, 2)   # [N, C, Dm, s, Hm, s, Wm, s]
    out = o8.reshape(N, Cout, Dm * s, Hm * s, Wm * s)[:, :, :Do, :Ho, :Wo]
    return out


# ---------------------------------------------------------------------------
def _reference(x, w, b, gamma, beta, stride, padding, eps=1e-5):
    """Independent scatter-add ConvTranspose3d + BN(train) + ReLU reference."""
    N, Cin, D, H, W = x.shape
    _, Cout, Kd, Kh, Kw = w.shape
    s, p = stride, padding
    Df, Hf, Wf = (D - 1) * s + Kd, (H - 1) * s + Kh, (W - 1) * s + Kw
    full = jnp.zeros((N, Cout, Df, Hf, Wf), jnp.float32)
    for kd in range(Kd):
        for kh in range(Kh):
            for kw in range(Kw):
                contrib = jnp.einsum('ncdhw,co->nodhw', x, w[:, :, kd, kh, kw])
                full = full.at[:, :,
                               kd:kd + (D - 1) * s + 1:s,
                               kh:kh + (H - 1) * s + 1:s,
                               kw:kw + (W - 1) * s + 1:s].add(contrib)
    Do, Ho, Wo = Df - 2 * p, Hf - 2 * p, Wf - 2 * p
    conv = full[:, :, p:p + Do, p:p + Ho, p:p + Wo] + b[None, :, None, None, None]
    mean = conv.mean(axis=(0, 2, 3, 4), keepdims=True)
    var = conv.var(axis=(0, 2, 3, 4), keepdims=True)
    yn = (conv - mean) * jax.lax.rsqrt(var + eps)
    yn = yn * gamma[None, :, None, None, None] + beta[None, :, None, None, None]
    return jnp.maximum(yn, 0.0)


if __name__ == "__main__":
    key = jax.random.PRNGKey(0)
    in_channels, out_channels = 4, 8
    kernel_size, stride, padding = 3, 2, 1
    N, D, H, W = 2, 5, 5, 5

    k1, k2, k3 = jax.random.split(key, 3)
    x = jax.random.normal(k1, (N, in_channels, D, H, W), jnp.float32)
    # PyTorch ConvTranspose3d weight layout: [in_channels, out_channels, kD, kH, kW]
    fan = in_channels * kernel_size ** 3
    bound = 1.0 / (fan ** 0.5)
    w = jax.random.uniform(
        k2, (in_channels, out_channels, kernel_size, kernel_size, kernel_size),
        jnp.float32, -bound, bound)
    b = jax.random.uniform(k3, (out_channels,), jnp.float32, -bound, bound)
    gamma = jnp.ones((out_channels,), jnp.float32)   # BatchNorm3d affine defaults
    beta = jnp.zeros((out_channels,), jnp.float32)

    fwd = jax.jit(functools.partial(conv3d_transpose_bn_relu,
                                    stride=stride, padding=padding))
    out = jax.block_until_ready(fwd(x, w, b, gamma, beta))

    ref = _reference(x, w, b, gamma, beta, stride, padding)
    assert out.shape == ref.shape, (out.shape, ref.shape)
    max_err = float(jnp.max(jnp.abs(out - ref)))
    assert jnp.allclose(out, ref, rtol=1e-4, atol=1e-4), max_err

    print("KERNEL_OK")
</pallas_src>

<mosaic_0001>
module attributes {stable_mosaic.version = 11 : i64} {
  func.func @_gemm_stats_kernel(%arg0: i32, %arg1: i32, %arg2: memref<1x32x256xf32, #tpu.memory_space<vmem>>, %arg3: memref<1x8x32xf32, #tpu.memory_space<vmem>>, %arg4: memref<1x8x256xf32, #tpu.memory_space<vmem>>, %arg5: memref<1x1x8x1xf32, #tpu.memory_space<vmem>>, %arg6: memref<1x1x8x1xf32, #tpu.memory_space<vmem>>) attributes {dimension_semantics = [#tpu.dimension_semantics<parallel>, #tpu.dimension_semantics<parallel>], iteration_bounds = array<i64: 8, 1>, scalar_prefetch = 0 : i64, scratch_operands = 0 : i64, tpu.core_type = #tpu.core_type<tc>, window_params = [{transform_indices = @transform_0, window_bounds = array<i64: 1, 32, 256>}, {transform_indices = @transform_1, window_bounds = array<i64: 1, 8, 32>}, {transform_indices = @transform_2, window_bounds = array<i64: 1, 8, 256>}, {transform_indices = @transform_3, window_bounds = array<i64: 1, 1, 8, 1>}, {transform_indices = @transform_4, window_bounds = array<i64: 1, 1, 8, 1>}]} {
    %c0 = arith.constant 0 : index
    %c0_0 = arith.constant 0 : index
    %c0_1 = arith.constant 0 : index
    %0 = vector.load %arg3[%c0, %c0_0, %c0_1] : memref<1x8x32xf32, #tpu.memory_space<vmem>>, vector<1x8x32xf32>
    %1 = vector.shape_cast %0 : vector<1x8x32xf32> to vector<8x32xf32>
    %c0_2 = arith.constant 0 : index
    %c0_3 = arith.constant 0 : index
    %c0_4 = arith.constant 0 : index
    %2 = vector.load %arg2[%c0_2, %c0_3, %c0_4] : memref<1x32x256xf32, #tpu.memory_space<vmem>>, vector<1x32x256xf32>
    %3 = vector.shape_cast %2 : vector<1x32x256xf32> to vector<32x256xf32>
    %cst = arith.constant dense<0.000000e+00> : vector<8x256xf32>
    %4 = tpu.matmul %1, %3, %cst {dimension_numbers = #tpu.dot_dimension_numbers<[1], [0], [0], [1], [0, 0, 1, 1], [], []>} : vector<8x32xf32>, vector<32x256xf32>, vector<8x256xf32> -> vector<8x256xf32>
    %c0_5 = arith.constant 0 : index
    %c0_6 = arith.constant 0 : index
    %c0_7 = arith.constant 0 : index
    %5 = vector.load %arg4[%c0_5, %c0_6, %c0_7] : memref<1x8x256xf32, #tpu.memory_space<vmem>>, vector<1x8x256xf32>
    %6 = vector.shape_cast %5 : vector<1x8x256xf32> to vector<8x256xf32>
    %7 = vector.shape_cast %4 : vector<8x256xf32> to vector<1x8x256xf32>
    tpu.vector_store %arg4[%c0_5, %c0_6, %c0_7], %7 {strides = array<i32>} : memref<1x8x256xf32, #tpu.memory_space<vmem>>, vector<1x8x256xf32>,
    %cst_8 = arith.constant dense<0.000000e+00> : vector<8xf32>
    %8 = vector.multi_reduction <add>, %4, %cst_8 [1] : vector<8x256xf32> to vector<8xf32>
    %9 = vector.shape_cast %8 : vector<8xf32> to vector<8x1xf32>
    %c0_9 = arith.constant 0 : index
    %c0_10 = arith.constant 0 : index
    %c0_11 = arith.constant 0 : index
    %c0_12 = arith.constant 0 : index
    %10 = vector.load %arg5[%c0_9, %c0_10, %c0_11, %c0_12] : memref<1x1x8x1xf32, #tpu.memory_space<vmem>>, vector<1x1x8x1xf32>
    %11 = vector.shape_cast %10 : vector<1x1x8x1xf32> to vector<8x1xf32>
    %12 = vector.shape_cast %9 : vector<8x1xf32> to vector<1x1x8x1xf32>
    tpu.vector_store %arg5[%c0_9, %c0_10, %c0_11, %c0_12], %12 {strides = array<i32>} : memref<1x1x8x1xf32, #tpu.memory_space<vmem>>, vector<1x1x8x1xf32>,
    %13 = arith.mulf %4, %4 : vector<8x256xf32>
    %cst_13 = arith.constant dense<0.000000e+00> : vector<8xf32>
    %14 = vector.multi_reduction <add>, %13, %cst_13 [1] : vector<8x256xf32> to vector<8xf32>
    %15 = vector.shape_cast %14 : vector<8xf32> to vector<8x1xf32>
    %c0_14 = arith.constant 0 : index
    %c0_15 = arith.constant 0 : index
    %c0_16 = arith.constant 0 : index
    %c0_17 = arith.constant 0 : index
    %16 = vector.load %arg6[%c0_14, %c0_15, %c0_16, %c0_17] : memref<1x1x8x1xf32, #tpu.memory_space<vmem>>, vector<1x1x8x1xf32>
    %17 = vector.shape_cast %16 : vector<1x1x8x1xf32> to vector<8x1xf32>
    %18 = vector.shape_cast %15 : vector<8x1xf32> to vector<1x1x8x1xf32>
    tpu.vector_store %arg6[%c0_14, %c0_15, %c0_16, %c0_17], %18 {strides = array<i32>} : memref<1x1x8x1xf32, #tpu.memory_space<vmem>>, vector<1x1x8x1xf32>,
    return
  }
  func.func @transform_0(%arg0: i32, %arg1: i32) -> (i32, i32, i32) {
    %c0_i32 = arith.constant 0 : i32
    %c0_i32_0 = arith.constant 0 : i32
    return %arg0, %c0_i32, %arg1 : i32, i32, i32
  }
  func.func @transform_1(%arg0: i32, %arg1: i32) -> (i32, i32, i32) {
    %c0_i32 = arith.constant 0 : i32
    %c0_i32_0 = arith.constant 0 : i32
    %c0_i32_1 = arith.constant 0 : i32
    return %arg0, %c0_i32, %c0_i32_0 : i32, i32, i32
  }
  func.func @transform_2(%arg0: i32, %arg1: i32) -> (i32, i32, i32) {
    %c0_i32 = arith.constant 0 : i32
    %c0_i32_0 = arith.constant 0 : i32
    return %arg0, %c0_i32, %arg1 : i32, i32, i32
  }
  func.func @transform_3(%arg0: i32, %arg1: i32) -> (i32, i32, i32, i32) {
    %c0_i32 = arith.constant 0 : i32
    %c0_i32_0 = arith.constant 0 : i32
    %c0_i32_1 = arith.constant 0 : i32
    return %arg0, %arg1, %c0_i32, %c0_i32_0 : i32, i32, i32, i32
  }
  func.func @transform_4(%arg0: i32, %arg1: i32) -> (i32, i32, i32, i32) {
    %c0_i32 = arith.constant 0 : i32
    %c0_i32_0 = arith.constant 0 : i32
    %c0_i32_1 = arith.constant 0 : i32
    return %arg0, %arg1, %c0_i32, %c0_i32_0 : i32, i32, i32, i32
  }
}

module attributes {stable_mosaic.version = 11 : i64} {
  func.func @_bn_relu_kernel(%arg0: i32, %arg1: i32, %arg2: memref<1x8x256xf32, #tpu.memory_space<vmem>>, %arg3: memref<8x1xf32, #tpu.memory_space<vmem>>, %arg4: memref<8x1xf32, #tpu.memory_space<vmem>>, %arg5: memref<1x8x256xf32, #tpu.memory_space<vmem>>) attributes {dimension_semantics = [#tpu.dimension_semantics<parallel>, #tpu.dimension_semantics<parallel>], iteration_bounds = array<i64: 8, 1>, scalar_prefetch = 0 : i64, scratch_operands = 0 : i64, tpu.core_type = #tpu.core_type<tc>, window_params = [{transform_indices = @transform_0, window_bounds = array<i64: 1, 8, 256>}, {pipeline_mode = #tpu.pipeline_mode<synchronous>, transform_indices = @transform_1, window_bounds = array<i64: 8, 1>}, {pipeline_mode = #tpu.pipeline_mode<synchronous>, transform_indices = @transform_2, window_bounds = array<i64: 8, 1>}, {transform_indices = @transform_3, window_bounds = array<i64: 1, 8, 256>}]} {
    %c0 = arith.constant 0 : index
    %c0_0 = arith.constant 0 : index
    %c0_1 = arith.constant 0 : index
    %0 = vector.load %arg2[%c0, %c0_0, %c0_1] : memref<1x8x256xf32, #tpu.memory_space<vmem>>, vector<1x8x256xf32>
    %1 = vector.shape_cast %0 : vector<1x8x256xf32> to vector<8x256xf32>
    %c0_2 = arith.constant 0 : index
    %c0_3 = arith.constant 0 : index
    %2 = vector.load %arg3[%c0_2, %c0_3] : memref<8x1xf32, #tpu.memory_space<vmem>>, vector<8x1xf32>
    %3 = vector.broadcast %2 : vector<8x1xf32> to vector<8x256xf32>
    %4 = arith.mulf %1, %3 : vector<8x256xf32>
    %c0_4 = arith.constant 0 : index
    %c0_5 = arith.constant 0 : index
    %5 = vector.load %arg4[%c0_4, %c0_5] : memref<8x1xf32, #tpu.memory_space<vmem>>, vector<8x1xf32>
    %6 = vector.broadcast %5 : vector<8x1xf32> to vector<8x256xf32>
    %7 = arith.addf %4, %6 : vector<8x256xf32>
    %cst = arith.constant 0.000000e+00 : f32
    %8 = vector.broadcast %cst : f32 to vector<8x256xf32>
    %9 = arith.maximumf %7, %8 : vector<8x256xf32>
    %c0_6 = arith.constant 0 : index
    %c0_7 = arith.constant 0 : index
    %c0_8 = arith.constant 0 : index
    %10 = vector.load %arg5[%c0_6, %c0_7, %c0_8] : memref<1x8x256xf32, #tpu.memory_space<vmem>>, vector<1x8x256xf32>
    %11 = vector.shape_cast %10 : vector<1x8x256xf32> to vector<8x256xf32>
    %12 = vector.shape_cast %9 : vector<8x256xf32> to vector<1x8x256xf32>
    tpu.vector_store %arg5[%c0_6, %c0_7, %c0_8], %12 {strides = array<i32>} : memref<1x8x256xf32, #tpu.memory_space<vmem>>, vector<1x8x256xf32>,
    return
  }
  func.func @transform_0(%arg0: i32, %arg1: i32) -> (i32, i32, i32) {
    %c0_i32 = arith.constant 0 : i32
    %c0_i32_0 = arith.constant 0 : i32
    return %arg0, %c0_i32, %arg1 : i32, i32, i32
  }
  func.func @transform_1(%arg0: i32, %arg1: i32) -> (i32, i32) {
    %c0_i32 = arith.constant 0 : i32
    %c0_i32_0 = arith.constant 0 : i32
    %c0_i32_1 = arith.constant 0 : i32
    return %c0_i32, %c0_i32_0 : i32, i32
  }
  func.func @transform_2(%arg0: i32, %arg1: i32) -> (i32, i32) {
    %c0_i32 = arith.constant 0 : i32
    %c0_i32_0 = arith.constant 0 : i32
    %c0_i32_1 = arith.constant 0 : i32
    return %c0_i32, %c0_i32_0 : i32, i32
  }
  func.func @transform_3(%arg0: i32, %arg1: i32) -> (i32, i32, i32) {
    %c0_i32 = arith.constant 0 : i32
    %c0_i32_0 = arith.constant 0 : i32
    return %arg0, %c0_i32, %arg1 : i32, i32, i32
  }
}

</mosaic_0001>

<llo_original>
// kernel: conv3d_transpose_bn_relu.2
$region0: #{conv3d_transpose_bn_relu.2}
  #allocation0 [shape = 'u32[]', space=smem, size = 0x4, offset = 0x4, fixed_abs, tag = 'smem constant byte address 0x4 - core index']
  #allocation1 [shape = 'u32[144,128]{1,0:T(1,128)}', space=vmem, size = 0x12000, scoped, tag = 'internal scratch']
  %s0 = inlined_call_operand.vmem [shape: f32[8,32,256], index: 0, kind: input, shape index: {}]
  %s1 = inlined_call_operand.vmem [shape: f32[8,8,32], index: 1, kind: input, shape index: {}]
  %s2 = inlined_call_operand.vmem [shape: f32[8,8,256], index: 2, kind: output, shape index: {0}]
  %s3 = inlined_call_operand.vmem [shape: f32[8,1,8,1], index: 3, kind: output, shape index: {1}]
  %s4 = inlined_call_operand.vmem [shape: f32[8,1,8,1], index: 4, kind: output, shape index: {2}]
  %5 = xla_tuple %s2, %s3, %s4
  %s6 = sld [smem:[#allocation0]]
  $region57: #{conv3d_transpose_bn_relu.2} parent=0
    _
  %s8 = ssub.s32 1, %s6
  %s9 = scalar_select 0, %s8, %s6
  loop: start=0, step=1, limit=10
  $region2: #{conv3d_transpose_bn_relu.2} parent=0 // loop_pre_header
    _
  $region3: #{conv3d_transpose_bn_relu.2} parent=0 // loop_header
    %s11 = sphi 0, %s15
    %p12 = scmp.ge.s32.totalorder %s11, 10
    %s18 = sphi 0, %s30
    %s19 = sphi 0, %s26
    %s20 = sphi 0, %s18
    %s21 = sphi 0, %s19
    %s22 = sphi 0, %s20
    %s23 = sphi 0, %s21
    %s35 = sphi 0, %s37
    %s38 = sphi 0, %s35
    %s39 = sphi 0, %s38
    %s55 = sphi 0, %s39
    %s61 = sphi 0, %s63
    %s64 = sphi 0, %s61
    %s65 = sphi 0, %s64
    %s81 = sphi 0, %s65
    %s89 = sphi 0, %s91
    %s92 = sphi 0, %s89
    %s93 = sphi 0, %s92
    %s109 = sphi 0, %s93
    %s117 = sphi 0, %s119
    %s120 = sphi 0, %s117
    %s121 = sphi 0, %s120
    %s137 = sphi 0, %s121
    %s145 = sphi 0, %s147
    %s148 = sphi 0, %s145
    %s149 = sphi 0, %s148
    %s165 = sphi 0, %s149
  $region4: #{conv3d_transpose_bn_relu.2} parent=0 // loop_header_branch
    %14 = sbr.rel (%p12) target = $region8
  $region5: #{conv3d_transpose_bn_relu.2} parent=0 // loop_body
    %s16 = ssub.s32 %s11, 1
    %s17 = ssub.s32 %s11, 2
    %s24 = sadd.s32 1, %s19
    %p25 = scmp.ge.s32.totalorder %s24, 1
    %s26 = scalar_select %p25, 0, %s24
    %s27 = sadd.s32 1, %s18
    %s28 = scalar_select %p25, %s27, %s18
    %p29 = scmp.ge.s32.totalorder %s28, 8
    %s30 = scalar_select %p29, 0, %s28
    %s31 = ssub.s32 %s18, %s30
    %s32 = ssub.s32 %s19, %s26
    %s33 = sor.u32 %s31, %s32
    %p34 = scmp.eq.s32.totalorder %s33, 0
    %s36 = sadd.s32 %s35, 1
    %s37 = scalar_select %p34, %s35, %s36
    %p40 = pneg %p34
    %p41 = scmp.eq.s32.totalorder %s11, 7
    %p42 = por %p40, %p41
    %p43 = scmp.ne.s32.totalorder %s35, %s38
    %p44 = scmp.eq.s32.totalorder %s11, 0
    %p45 = por %p43, %p44
    %p46 = scmp.ne.s32.totalorder %s35, %s38
    %p47 = scmp.eq.s32.totalorder %s16, 7
    %p48 = por %p46, %p47
    %p49 = scmp.ne.s32.totalorder %s38, %s39
    %p50 = scmp.eq.s32.totalorder %s16, 0
    %p51 = por %p49, %p50
    %p52 = scmp.ne.s32.totalorder %s38, %s39
    %p53 = scmp.eq.s32.totalorder %s17, 7
    %p54 = por %p52, %p53
    %p56 = scmp.ne.s32.totalorder %s39, %s55
    %p57 = scmp.eq.s32.totalorder %s17, 0
    %p58 = por %p56, %p57
    %s59 = ssub.s32 %s18, %s30
    %p60 = scmp.eq.s32.totalorder %s59, 0
    %s62 = sadd.s32 %s61, 1
    %s63 = scalar_select %p60, %s61, %s62
    %p66 = pneg %p60
    %p67 = scmp.eq.s32.totalorder %s11, 7
    %p68 = por %p66, %p67
    %p69 = scmp.ne.s32.totalorder %s61, %s64
    %p70 = scmp.eq.s32.totalorder %s11, 0
    %p71 = por %p69, %p70
    %p72 = scmp.ne.s32.totalorder %s61, %s64
    %p73 = scmp.eq.s32.totalorder %s16, 7
    %p74 = por %p72, %p73
    %p75 = scmp.ne.s32.totalorder %s64, %s65
    %p76 = scmp.eq.s32.totalorder %s16, 0
    %p77 = por %p75, %p76
    %p78 = scmp.ne.s32.totalorder %s64, %s65
    %p79 = scmp.eq.s32.totalorder %s17, 7
    %p80 = por %p78, %p79
    %p82 = scmp.ne.s32.totalorder %s65, %s81
    %p83 = scmp.eq.s32.totalorder %s17, 0
    %p84 = por %p82, %p83
    %s85 = ssub.s32 %s18, %s30
    %s86 = ssub.s32 %s19, %s26
    %s87 = sor.u32 %s85, %s86
    %p88 = scmp.eq.s32.totalorder %s87, 0
    %s90 = sadd.s32 %s89, 1
    %s91 = scalar_select %p88, %s89, %s90
    %p94 = pneg %p88
    %p95 = scmp.eq.s32.totalorder %s11, 7
    %p96 = por %p94, %p95
    %p97 = scmp.ne.s32.totalorder %s89, %s92
    %p98 = scmp.eq.s32.totalorder %s11, 0
    %p99 = por %p97, %p98
    %p100 = scmp.ne.s32.totalorder %s89, %s92
    %p101 = scmp.eq.s32.totalorder %s16, 7
    %p102 = por %p100, %p101
    %p103 = scmp.ne.s32.totalorder %s92, %s93
    %p104 = scmp.eq.s32.totalorder %s16, 0
    %p105 = por %p103, %p104
    %p106 = scmp.ne.s32.totalorder %s92, %s93
    %p107 = scmp.eq.s32.totalorder %s17, 7
    %p108 = por %p106, %p107
    %p110 = scmp.ne.s32.totalorder %s93, %s109
    %p111 = scmp.eq.s32.totalorder %s17, 0
    %p112 = por %p110, %p111
    %s113 = ssub.s32 %s18, %s30
    %s114 = ssub.s32 %s19, %s26
    %s115 = sor.u32 %s113, %s114
    %p116 = scmp.eq.s32.totalorder %s115, 0
    %s118 = sadd.s32 %s117, 1
    %s119 = scalar_select %p116, %s117, %s118
    %p122 = pneg %p116
    %p123 = scmp.eq.s32.totalorder %s11, 7
    %p124 = por %p122, %p123
    %p125 = scmp.ne.s32.totalorder %s117, %s120
    %p126 = scmp.eq.s32.totalorder %s11, 0
    %p127 = por %p125, %p126
    %p128 = scmp.ne.s32.totalorder %s117, %s120
    %p129 = scmp.eq.s32.totalorder %s16, 7
    %p130 = por %p128, %p129
    %p131 = scmp.ne.s32.totalorder %s120, %s121
    %p132 = scmp.eq.s32.totalorder %s16, 0
    %p133 = por %p131, %p132
    %p134 = scmp.ne.s32.totalorder %s120, %s121
    %p135 = scmp.eq.s32.totalorder %s17, 7
    %p136 = por %p134, %p135
    %p138 = scmp.ne.s32.totalorder %s121, %s137
    %p139 = scmp.eq.s32.totalorder %s17, 0
    %p140 = por %p138, %p139
    %s141 = ssub.s32 %s18, %s30
    %s142 = ssub.s32 %s19, %s26
    %s143 = sor.u32 %s141, %s142
    %p144 = scmp.eq.s32.totalorder %s143, 0
    %s146 = sadd.s32 %s145, 1
    %s147 = scalar_select %p144, %s145, %s146
    %p150 = pneg %p144
    %p151 = scmp.eq.s32.totalorder %s11, 7
    %p152 = por %p150, %p151
    %p153 = scmp.ne.s32.totalorder %s145, %s148
    %p154 = scmp.eq.s32.totalorder %s11, 0
    %p155 = por %p153, %p154
    %p156 = scmp.ne.s32.totalorder %s145, %s148
    %p157 = scmp.eq.s32.totalorder %s16, 7
    %p158 = por %p156, %p157
    %p159 = scmp.ne.s32.totalorder %s148, %s149
    %p160 = scmp.eq.s32.totalorder %s16, 0
    %p161 = por %p159, %p160
    %p162 = scmp.ne.s32.totalorder %s148, %s149
    %p163 = scmp.eq.s32.totalorder %s17, 7
    %p164 = por %p162, %p163
    %p166 = scmp.ne.s32.totalorder %s149, %s165
    %p167 = scmp.eq.s32.totalorder %s17, 0
    %p168 = por %p166, %p167
    %p169 = scmp.le.s32.totalorder 1, %s11
    %p170 = scmp.lt.s32.totalorder %s11, 9
    %p171 = pnand %p169, %p170
    %p172 = pneg %p171
    // Predicated region
    $region9: #{conv3d_transpose_bn_relu.2} parent=5 // pred_check
      _
    $region10: #{conv3d_transpose_bn_relu.2} parent=5 // pred_check_branch
      %174 = sbr.rel (%p171) target = $region12
    $region11: #{conv3d_transpose_bn_relu.2} parent=5 // pred_region
      %s175 = ssub.s32 %s11, 1
    $region12: #{conv3d_transpose_bn_relu.2} parent=5 // pred_fallthru
      _
    %p176 = scmp.lt.s32.totalorder %s11, 8
    // Predicated region
    $region13: #{conv3d_transpose_bn_relu.2} parent=5 // pred_check
      %p177 = pneg %p176
    $region14: #{conv3d_transpose_bn_relu.2} parent=5 // pred_check_branch
      %179 = sbr.rel (%p177) target = $region16
    $region15: #{conv3d_transpose_bn_relu.2} parent=5 // pred_region
      // Predicated region
      $region17: #{conv3d_transpose_bn_relu.2} parent=15 // pred_check
        %p180 = pneg %p45
      $region18: #{conv3d_transpose_bn_relu.2} parent=15 // pred_check_branch
        %182 = sbr.rel (%p180) target = $region20
      $region19: #{conv3d_transpose_bn_relu.2} parent=15 // pred_region
        %s183 = smul.u32 2, %s19
        %p184 = scmp.lt.s32.totalorder %s18, 7
        %s185 = scalar_select %p184, %s18, 7
        %p186 = scmp.lt.s32.totalorder %s183, 1
        %s187 = scalar_select %p186, %s183, 1
        %s188 = smul.addr %s185, 8
        %s189 = sadd.s32 %s187, %s188
        %s190 = smul.addr %s189, 8
        %s191 = scalar_lea.vmem %s0, %s190
        %s192 = smul.u32 2, %s19
      $region20: #{conv3d_transpose_bn_relu.2} parent=15 // pred_fallthru
        _
      // Predicated region
      $region21: #{conv3d_transpose_bn_relu.2} parent=15 // pred_check
        %p193 = pneg %p71
      $region22: #{conv3d_transpose_bn_relu.2} parent=15 // pred_check_branch
        %195 = sbr.rel (%p193) target = $region24
      $region23: #{conv3d_transpose_bn_relu.2} parent=15 // pred_region
        %p196 = scmp.lt.s32.totalorder %s18, 7
        %s197 = scalar_select %p196, %s18, 7
        %s198 = smul.addr %s197, 8
        %s199 = scalar_lea.vmem %s1, %s198
      $region24: #{conv3d_transpose_bn_relu.2} parent=15 // pred_fallthru
        _
    $region16: #{conv3d_transpose_bn_relu.2} parent=5 // pred_fallthru
      _
    %p200 = scmp.le.s32.totalorder 1, %s11
    %p201 = scmp.lt.s32.totalorder %s11, 9
    %p202 = pnand %p200, %p201
    %p203 = pneg %p202
    // Predicated region
    $region25: #{conv3d_transpose_bn_relu.2} parent=5 // pred_check
      _
    $region26: #{conv3d_transpose_bn_relu.2} parent=5 // pred_check_branch
      %205 = sbr.rel (%p202) target = $region28
    $region27: #{conv3d_transpose_bn_relu.2} parent=5 // pred_region
      %s206 = ssub.s32 %s11, 1
      %s207 = smul.u32 2, %s21
      %p208 = scmp.lt.s32.totalorder %s20, 7
      %s209 = scalar_select %p208, %s20, 7
      %p210 = scmp.lt.s32.totalorder %s207, 1
      %s211 = scalar_select %p210, %s207, 1
      %s212 = smul.addr %s209, 8
      %s213 = sadd.s32 %s211, %s212
      %s214 = smul.addr %s213, 8
      %s215 = scalar_lea.vmem %s0, %s214
      %p216 = pneg %p51
      %p217 = pneg %p48
      %p218 = scmp.lt.s32.totalorder %s20, 7
      %s219 = scalar_select %p218, %s20, 7
      %s220 = smul.addr %s219, 8
      %s221 = scalar_lea.vmem %s1, %s220
      %p222 = pneg %p77
      %p223 = pneg %p74
      %p224 = pneg %p105
      %p225 = pneg %p102
      %s226 = smul.u32 2, %s21
      %p227 = scmp.lt.s32.totalorder %s20, 7
      %s228 = scalar_select %p227, %s20, 7
      %p229 = scmp.lt.s32.totalorder %s226, 1
      %s230 = scalar_select %p229, %s226, 1
      %s231 = smul.addr %s228, 2
      %s232 = sadd.s32 %s230, %s231
      %s233 = smul.addr %s232, 8
      %s234 = scalar_lea.vmem %s2, %s233
      %p235 = pneg %p133
      %p236 = pneg %p130
      %p237 = scmp.lt.s32.totalorder %s20, 7
      %s238 = scalar_select %p237, %s20, 7
      %p239 = scmp.lt.s32.totalorder %s21, 0
      %s240 = scalar_select %p239, %s21, 0
      %s241 = sadd.s32 %s240, %s238
      %s242 = smul.addr %s241, 8
      %s243 = scalar_lea.vmem %s3, %s242
      %p244 = pneg %p161
      %p245 = pneg %p158
      %p246 = scmp.lt.s32.totalorder %s20, 7
      %s247 = scalar_select %p246, %s20, 7
      %p248 = scmp.lt.s32.totalorder %s21, 0
      %s249 = scalar_select %p248, %s21, 0
      %s250 = sadd.s32 %s249, %s247
      %s251 = smul.addr %s250, 8
      %s252 = scalar_lea.vmem %s4, %s251
      %s253 = smul.u32 2, %s21
      %p254 = scmp.lt.s32.totalorder %s20, 7
      %s255 = scalar_select %p254, %s20, 7
      %p256 = scmp.lt.s32.totalorder %s253, 1
      %s257 = scalar_select %p256, %s253, 1
      %s258 = smul.addr %s255, 8
      %s259 = sadd.s32 %s257, %s258
      %s260 = smul.addr %s259, 8
      %s261 = scalar_lea.vmem %s0, %s260
      %s262 = smul.u32 2, %s21
      %p263 = scmp.lt.s32.totalorder %s20, 7
      %s264 = scalar_select %p263, %s20, 7
      %s265 = smul.addr %s264, 8
      %s266 = scalar_lea.vmem %s1, %s265
      %s267 = smul.u32 2, %s21
      %p268 = scmp.lt.s32.totalorder %s20, 7
      %s269 = scalar_select %p268, %s20, 7
      %p270 = scmp.lt.s32.totalorder %s267, 1
      %s271 = scalar_select %p270, %s267, 1
      %s272 = smul.addr %s269, 2
      %s273 = sadd.s32 %s271, %s272
      %s274 = smul.addr %s273, 8
      %s275 = scalar_lea.vmem %s2, %s274
      %s276 = smul.u32 2, %s21
      %p277 = scmp.lt.s32.totalorder %s20, 7
      %s278 = scalar_select %p277, %s20, 7
      %p279 = scmp.lt.s32.totalorder %s21, 0
      %s280 = scalar_select %p279, %s21, 0
      %s281 = sadd.s32 %s280, %s278
      %s282 = smul.addr %s281, 8
      %s283 = scalar_lea.vmem %s3, %s282
      %p284 = scmp.lt.s32.totalorder %s20, 7
      %s285 = scalar_select %p284, %s20, 7
      %p286 = scmp.lt.s32.totalorder %s21, 0
      %s287 = scalar_select %p286, %s21, 0
      %s288 = sadd.s32 %s287, %s285
      %s289 = smul.addr %s288, 8
      %s290 = scalar_lea.vmem %s4, %s289
      %v291 = vld [vmem:[%s266] sm:$0xff]
      %v292 = vld [vmem:[%s261] sm:$0xff]
      %v293 = vld [vmem:[%s261 + $0x8] sm:$0xff]
      %v294 = vld [vmem:[%s261 + $0x10] sm:$0xff]
      %v295 = vld [vmem:[%s261 + $0x18] sm:$0xff]
      %v296 = vld [vmem:[%s261 + $0x20] sm:$0xff]
      %v297 = vld [vmem:[%s261 + $0x28] sm:$0xff]
      %v298 = vld [vmem:[%s261 + $0x30] sm:$0xff]
      %v299 = vld [vmem:[%s261 + $0x38] sm:$0xff]
      %vm300 = vcmask 261120
      %v302 = vsel %vm300, %v291, 0
      %304 = vmatprep.subr.mxu0 0.0
      %305 = vmatpush1.msra.mxu0 0.0
      %306 = vmatprep.subr.mxu0 0.0
      %307 = vmatpush1.msra.mxu0 0.0
      %308 = vmatprep.subr.mxu0 0.0
      %309 = vmatpush1.msra.mxu0 0.0
      %310 = vmatprep.subr.mxu0 0.0
      %311 = vmatpush1.msra.mxu0 0.0
      %312 = vmatprep.subr.mxu0 0.0
      %313 = vmatpush1.msra.mxu0 0.0
      %314 = vmatprep.subr.mxu0 0.0
      %315 = vmatpush1.msra.mxu0 0.0
      %316 = vmatprep.subr.mxu0 0.0
      %317 = vmatpush1.msra.mxu0 0.0
      %318 = vmatprep.subr.mxu0 0.0
      %319 = vmatpush1.msra.mxu0 0.0
      %320 = vmatprep.subr.mxu0 0.0
      %321 = vmatpush1.msra.mxu0 0.0
      %322 = vmatprep.subr.mxu0 0.0
      %323 = vmatpush1.msra.mxu0 0.0
      %324 = vmatprep.subr.mxu0 0.0
      %325 = vmatpush1.msra.mxu0 0.0
      %326 = vmatprep.subr.mxu0 0.0
      %327 = vmatpush1.msra.mxu0 0.0
      %328 = vmatprep.subr.mxu0 %v299
      %329 = vmatpush1.msra.mxu0 %v298
      %330 = vmatprep.subr.mxu0 %v297
      %331 = vmatpush1.msra.mxu0 %v296
      %332 = vmatprep.subr.mxu0 %v295
      %333 = vmatpush1.msra.mxu0 %v294
      %334 = vmatprep.subr.mxu0 %v293
      %335 = vmatpush1.msra.mxu0 %v292
      %336 = vmatprep.subr.mxu0 0.0
      %337 = vmatpush2.msra.mxu0 0.0
      %338 = vmatprep.subr.mxu0 0.0
      %339 = vmatpush2.msra.mxu0 0.0
      %340 = vmatprep.subr.mxu0 0.0
      %341 = vmatpush2.msra.mxu0 0.0
      %342 = vmatprep.subr.mxu0 0.0
      %343 = vmatpush2.msra.mxu0 0.0
      %344 = vmatprep.subr.mxu0 0.0
      %345 = vmatpush2.msra.mxu0 0.0
      %346 = vmatprep.subr.mxu0 0.0
      %347 = vmatpush2.msra.mxu0 0.0
      %348 = vmatprep.subr.mxu0 0.0
      %349 = vmatpush2.msra.mxu0 0.0
      %350 = vmatprep.subr.mxu0 0.0
      %351 = vmatpush2.msra.mxu0 0.0
      %352 = vmatprep.subr.mxu0 0.0
      %353 = vmatpush2.msra.mxu0 0.0
      %354 = vmatprep.subr.mxu0 0.0
      %355 = vmatpush2.msra.mxu0 0.0
      %356 = vmatprep.subr.mxu0 0.0
      %357 = vmatpush2.msra.mxu0 0.0
      %358 = vmatprep.subr.mxu0 0.0
      %359 = vmatpush2.msra.mxu0 0.0
      %360 = vmatprep.subr.mxu0 0.0
      %361 = vmatpush2.msra.mxu0 0.0
      %362 = vmatprep.subr.mxu0 0.0
      %363 = vmatpush2.msra.mxu0 0.0
      %364 = vmatprep.subr.mxu0 0.0
      %365 = vmatpush2.msra.mxu0 0.0
      %366 = vmatprep.subr.mxu0 0.0
      %367 = vmatpush2.msra.mxu0 0.0
      %368 = vmatprep.mubr.f32.mxu0 0.0
      %369 = vmatmul.mubr.f32.gmra.mxu0 %v302
      %v370 = vpop.f32.mrf.mxu0
      %v371 = vadd.f32 0.0, %v370
      %v372 = vpop.f32.mrf.mxu0
      %v373 = vadd.f32 0.0, %v372
      %374 = vdwg.mxu0
      %375 = vst [vmem:[%s275] sm:$0xff] %v371
      %376 = vst [vmem:[%s275 + $0x8] sm:$0xff] %v373
      %v377 = vadd.f32 %v371, %v373
      %378 = vadd.xlane.f32.xlu0 %v377
      %v379 = vpop.xlane.xlu0 %378
      %vm380 = vcmask 7168
      %381 = vst.msk [vmem:[%s283] sm:$0xff] %vm380, %v379
      %v382 = vmul.f32 %v371, %v371
      %v383 = vmul.f32 %v373, %v373
      %v384 = vadd.f32 %v382, %v383
      %385 = vadd.xlane.f32.xlu0 %v384
      %v386 = vpop.xlane.xlu0 %385
      %387 = vst.msk [vmem:[%s290] sm:$0xff] %vm380, %v386
      %s388 = smul.u32 2, %s21
      %p389 = scmp.lt.s32.totalorder %s20, 7
      %s390 = scalar_select %p389, %s20, 7
      %p391 = scmp.lt.s32.totalorder %s388, 1
      %s392 = scalar_select %p391, %s388, 1
      %s393 = smul.addr %s390, 2
      %s394 = sadd.s32 %s392, %s393
      %s395 = smul.addr %s394, 8
      %s396 = scalar_lea.vmem %s2, %s395
      %p397 = scmp.lt.s32.totalorder %s20, 7
      %s398 = scalar_select %p397, %s20, 7
      %p399 = scmp.lt.s32.totalorder %s21, 0
      %s400 = scalar_select %p399, %s21, 0
      %s401 = sadd.s32 %s400, %s398
      %s402 = smul.addr %s401, 8
      %s403 = scalar_lea.vmem %s3, %s402
      %p404 = scmp.lt.s32.totalorder %s20, 7
      %s405 = scalar_select %p404, %s20, 7
      %p406 = scmp.lt.s32.totalorder %s21, 0
      %s407 = scalar_select %p406, %s21, 0
      %s408 = sadd.s32 %s407, %s405
      %s409 = smul.addr %s408, 8
      %s410 = scalar_lea.vmem %s4, %s409
      // Predicated region
      $region29: #{conv3d_transpose_bn_relu.2} parent=27 // pred_check
        %p411 = pneg %p102
      $region30: #{conv3d_transpose_bn_relu.2} parent=27 // pred_check_branch
        %413 = sbr.rel (%p411) target = $region32
      $region31: #{conv3d_transpose_bn_relu.2} parent=27 // pred_region
        %s414 = smul.u32 2, %s21
      $region32: #{conv3d_transpose_bn_relu.2} parent=27 // pred_fallthru
        _
      // Predicated region
      $region33: #{conv3d_transpose_bn_relu.2} parent=27 // pred_check
        %p415 = pneg %p130
      $region34: #{conv3d_transpose_bn_relu.2} parent=27 // pred_check_branch
        %417 = sbr.rel (%p415) target = $region36
      $region35: #{conv3d_transpose_bn_relu.2} parent=27 // pred_region
        _
      $region36: #{conv3d_transpose_bn_relu.2} parent=27 // pred_fallthru
        _
      // Predicated region
      $region37: #{conv3d_transpose_bn_relu.2} parent=27 // pred_check
        %p418 = pneg %p158
      $region38: #{conv3d_transpose_bn_relu.2} parent=27 // pred_check_branch
        %420 = sbr.rel (%p418) target = $region40
      $region39: #{conv3d_transpose_bn_relu.2} parent=27 // pred_region
        _
      $region40: #{conv3d_transpose_bn_relu.2} parent=27 // pred_fallthru
        _
    $region28: #{conv3d_transpose_bn_relu.2} parent=5 // pred_fallthru
      _
    %p421 = scmp.le.s32.totalorder 2, %s11
    // Predicated region
    $region41: #{conv3d_transpose_bn_relu.2} parent=5 // pred_check
      %p422 = pneg %p421
    $region42: #{conv3d_transpose_bn_relu.2} parent=5 // pred_check_branch
      %424 = sbr.rel (%p422) target = $region44
    $region43: #{conv3d_transpose_bn_relu.2} parent=5 // pred_region
      %s425 = ssub.s32 %s11, 2
      // Predicated region
      $region45: #{conv3d_transpose_bn_relu.2} parent=43 // pred_check
        %p426 = pneg %p108
      $region46: #{conv3d_transpose_bn_relu.2} parent=43 // pred_check_branch
        %428 = sbr.rel (%p426) target = $region48
      $region47: #{conv3d_transpose_bn_relu.2} parent=43 // pred_region
        %s429 = smul.u32 2, %s23
        %p430 = scmp.lt.s32.totalorder %s22, 7
        %s431 = scalar_select %p430, %s22, 7
        %p432 = scmp.lt.s32.totalorder %s429, 1
        %s433 = scalar_select %p432, %s429, 1
        %s434 = smul.addr %s431, 2
        %s435 = sadd.s32 %s433, %s434
        %s436 = smul.addr %s435, 8
        %s437 = scalar_lea.vmem %s2, %s436
      $region48: #{conv3d_transpose_bn_relu.2} parent=43 // pred_fallthru
        _
      // Predicated region
      $region49: #{conv3d_transpose_bn_relu.2} parent=43 // pred_check
        %p438 = pneg %p136
      $region50: #{conv3d_transpose_bn_relu.2} parent=43 // pred_check_branch
        %440 = sbr.rel (%p438) target = $region52
      $region51: #{conv3d_transpose_bn_relu.2} parent=43 // pred_region
        %p441 = scmp.lt.s32.totalorder %s22, 7
        %s442 = scalar_select %p441, %s22, 7
        %p443 = scmp.lt.s32.totalorder %s23, 0
        %s444 = scalar_select %p443, %s23, 0
        %s445 = sadd.s32 %s444, %s442
        %s446 = smul.addr %s445, 8
        %s447 = scalar_lea.vmem %s3, %s446
      $region52: #{conv3d_transpose_bn_relu.2} parent=43 // pred_fallthru
        _
      // Predicated region
      $region53: #{conv3d_transpose_bn_relu.2} parent=43 // pred_check
        %p448 = pneg %p164
      $region54: #{conv3d_transpose_bn_relu.2} parent=43 // pred_check_branch
        %450 = sbr.rel (%p448) target = $region56
      $region55: #{conv3d_transpose_bn_relu.2} parent=43 // pred_region
        %p451 = scmp.lt.s32.totalorder %s22, 7
        %s452 = scalar_select %p451, %s22, 7
        %p453 = scmp.lt.s32.totalorder %s23, 0
        %s454 = scalar_select %p453, %s23, 0
        %s455 = sadd.s32 %s454, %s452
        %s456 = smul.addr %s455, 8
        %s457 = scalar_lea.vmem %s4, %s456
      $region56: #{conv3d_transpose_bn_relu.2} parent=43 // pred_fallthru
        _
    $region44: #{conv3d_transpose_bn_relu.2} parent=5 // pred_fallthru
      _
  $region6: #{conv3d_transpose_bn_relu.2} parent=0 // loop_footer
    %s15 = sadd.s32 1, %s11
  $region7: #{conv3d_transpose_bn_relu.2} parent=0 // loop_footer_branch
    %10 = sbr.rel target = $region3
  $region8: #{conv3d_transpose_bn_relu.2} parent=0 // loop_exit
    _

// kernel: conv3d_transpose_bn_relu.3
$region0: #{conv3d_transpose_bn_relu.3}
  #allocation0 [shape = 'u32[]', space=smem, size = 0x4, offset = 0x4, fixed_abs, tag = 'smem constant byte address 0x4 - core index']
  #allocation1 [shape = 'u32[144,128]{1,0:T(1,128)}', space=vmem, size = 0x12000, scoped, tag = 'internal scratch']
  %s0 = inlined_call_operand.vmem [shape: f32[8,8,256], index: 0, kind: input, shape index: {}, may-alias: {0,3}]
  %s1 = inlined_call_operand.vmem [shape: f32[8,1], index: 1, kind: input, shape index: {}]
  %s2 = inlined_call_operand.vmem [shape: f32[8,1], index: 2, kind: input, shape index: {}]
  %s3 = inlined_call_operand.vmem [shape: f32[8,8,256], index: 3, kind: output, shape index: {}, may-alias: {0,3}]
  %s4 = sld [smem:[#allocation0]]
  $region45: #{conv3d_transpose_bn_relu.3} parent=0
    _
  %s6 = ssub.s32 1, %s4
  %s7 = scalar_select 0, %s6, %s4
  loop: start=0, step=1, limit=10
  $region2: #{conv3d_transpose_bn_relu.3} parent=0 // loop_pre_header
    _
  $region3: #{conv3d_transpose_bn_relu.3} parent=0 // loop_header
    %s9 = sphi 0, %s13
    %p10 = scmp.ge.s32.totalorder %s9, 10
    %s16 = sphi 0, %s28
    %s17 = sphi 0, %s24
    %s18 = sphi 0, %s16
    %s19 = sphi 0, %s17
    %s20 = sphi 0, %s18
    %s21 = sphi 0, %s19
    %s33 = sphi 0, %s35
    %s36 = sphi 0, %s33
    %s37 = sphi 0, %s36
    %s53 = sphi 0, %s37
    %s57 = sphi 0, %s57
    %s59 = sphi 0, %s57
    %s60 = sphi 0, %s59
    %s74 = sphi 0, %s60
    %s78 = sphi 0, %s78
    %s80 = sphi 0, %s78
    %s81 = sphi 0, %s80
    %s95 = sphi 0, %s81
    %s103 = sphi 0, %s105
    %s106 = sphi 0, %s103
    %s107 = sphi 0, %s106
    %s123 = sphi 0, %s107
  $region4: #{conv3d_transpose_bn_relu.3} parent=0 // loop_header_branch
    %12 = sbr.rel (%p10) target = $region8
  $region5: #{conv3d_transpose_bn_relu.3} parent=0 // loop_body
    %s14 = ssub.s32 %s9, 1
    %s15 = ssub.s32 %s9, 2
    %s22 = sadd.s32 1, %s17
    %p23 = scmp.ge.s32.totalorder %s22, 1
    %s24 = scalar_select %p23, 0, %s22
    %s25 = sadd.s32 1, %s16
    %s26 = scalar_select %p23, %s25, %s16
    %p27 = scmp.ge.s32.totalorder %s26, 8
    %s28 = scalar_select %p27, 0, %s26
    %s29 = ssub.s32 %s16, %s28
    %s30 = ssub.s32 %s17, %s24
    %s31 = sor.u32 %s29, %s30
    %p32 = scmp.eq.s32.totalorder %s31, 0
    %s34 = sadd.s32 %s33, 1
    %s35 = scalar_select %p32, %s33, %s34
    %p38 = pneg %p32
    %p39 = scmp.eq.s32.totalorder %s9, 7
    %p40 = por %p38, %p39
    %p41 = scmp.ne.s32.totalorder %s33, %s36
    %p42 = scmp.eq.s32.totalorder %s9, 0
    %p43 = por %p41, %p42
    %p44 = scmp.ne.s32.totalorder %s33, %s36
    %p45 = scmp.eq.s32.totalorder %s14, 7
    %p46 = por %p44, %p45
    %p47 = scmp.ne.s32.totalorder %s36, %s37
    %p48 = scmp.eq.s32.totalorder %s14, 0
    %p49 = por %p47, %p48
    %p50 = scmp.ne.s32.totalorder %s36, %s37
    %p51 = scmp.eq.s32.totalorder %s15, 7
    %p52 = por %p50, %p51
    %p54 = scmp.ne.s32.totalorder %s37, %s53
    %p55 = scmp.eq.s32.totalorder %s15, 0
    %p56 = por %p54, %p55
    %s58 = sadd.s32 %s57, 1
    %p61 = scmp.eq.s32.totalorder %s9, 7
    %p62 = scmp.ne.s32.totalorder %s57, %s59
    %p63 = scmp.eq.s32.totalorder %s9, 0
    %p64 = por %p62, %p63
    %p65 = scmp.ne.s32.totalorder %s57, %s59
    %p66 = scmp.eq.s32.totalorder %s14, 7
    %p67 = por %p65, %p66
    %p68 = scmp.ne.s32.totalorder %s59, %s60
    %p69 = scmp.eq.s32.totalorder %s14, 0
    %p70 = por %p68, %p69
    %p71 = scmp.ne.s32.totalorder %s59, %s60
    %p72 = scmp.eq.s32.totalorder %s15, 7
    %p73 = por %p71, %p72
    %p75 = scmp.ne.s32.totalorder %s60, %s74
    %p76 = scmp.eq.s32.totalorder %s15, 0
    %p77 = por %p75, %p76
    %s79 = sadd.s32 %s78, 1
    %p82 = scmp.eq.s32.totalorder %s9, 7
    %p83 = scmp.ne.s32.totalorder %s78, %s80
    %p84 = scmp.eq.s32.totalorder %s9, 0
    %p85 = por %p83, %p84
    %p86 = scmp.ne.s32.totalorder %s78, %s80
    %p87 = scmp.eq.s32.totalorder %s14, 7
    %p88 = por %p86, %p87
    %p89 = scmp.ne.s32.totalorder %s80, %s81
    %p90 = scmp.eq.s32.totalorder %s14, 0
    %p91 = por %p89, %p90
    %p92 = scmp.ne.s32.totalorder %s80, %s81
    %p93 = scmp.eq.s32.totalorder %s15, 7
    %p94 = por %p92, %p93
    %p96 = scmp.ne.s32.totalorder %s81, %s95
    %p97 = scmp.eq.s32.totalorder %s15, 0
    %p98 = por %p96, %p97
    %s99 = ssub.s32 %s16, %s28
    %s100 = ssub.s32 %s17, %s24
    %s101 = sor.u32 %s99, %s100
    %p102 = scmp.eq.s32.totalorder %s101, 0
    %s104 = sadd.s32 %s103, 1
    %s105 = scalar_select %p102, %s103, %s104
    %p108 = pneg %p102
    %p109 = scmp.eq.s32.totalorder %s9, 7
    %p110 = por %p108, %p109
    %p111 = scmp.ne.s32.totalorder %s103, %s106
    %p112 = scmp.eq.s32.totalorder %s9, 0
    %p113 = por %p111, %p112
    %p114 = scmp.ne.s32.totalorder %s103, %s106
    %p115 = scmp.eq.s32.totalorder %s14, 7
    %p116 = por %p114, %p115
    %p117 = scmp.ne.s32.totalorder %s106, %s107
    %p118 = scmp.eq.s32.totalorder %s14, 0
    %p119 = por %p117, %p118
    %p120 = scmp.ne.s32.totalorder %s106, %s107
    %p121 = scmp.eq.s32.totalorder %s15, 7
    %p122 = por %p120, %p121
    %p124 = scmp.ne.s32.totalorder %s107, %s123
    %p125 = scmp.eq.s32.totalorder %s15, 0
    %p126 = por %p124, %p125
    %p127 = scmp.le.s32.totalorder 1, %s9
    %p128 = scmp.lt.s32.totalorder %s9, 9
    %p129 = pnand %p127, %p128
    %p130 = pneg %p129
    // Predicated region
    $region9: #{conv3d_transpose_bn_relu.3} parent=5 // pred_check
      _
    $region10: #{conv3d_transpose_bn_relu.3} parent=5 // pred_check_branch
      %132 = sbr.rel (%p129) target = $region12
    $region11: #{conv3d_transpose_bn_relu.3} parent=5 // pred_region
      %s133 = ssub.s32 %s9, 1
      // Predicated region
      $region13: #{conv3d_transpose_bn_relu.3} parent=11 // pred_check
        %p134 = pneg %p70
      $region14: #{conv3d_transpose_bn_relu.3} parent=11 // pred_check_branch
        %136 = sbr.rel (%p134) target = $region16
      $region15: #{conv3d_transpose_bn_relu.3} parent=11 // pred_region
        _
      $region16: #{conv3d_transpose_bn_relu.3} parent=11 // pred_fallthru
        _
      // Predicated region
      $region17: #{conv3d_transpose_bn_relu.3} parent=11 // pred_check
        %p137 = pneg %p91
      $region18: #{conv3d_transpose_bn_relu.3} parent=11 // pred_check_branch
        %139 = sbr.rel (%p137) target = $region20
      $region19: #{conv3d_transpose_bn_relu.3} parent=11 // pred_region
        _
      $region20: #{conv3d_transpose_bn_relu.3} parent=11 // pred_fallthru
        _
    $region12: #{conv3d_transpose_bn_relu.3} parent=5 // pred_fallthru
      _
    %p140 = scmp.lt.s32.totalorder %s9, 8
    // Predicated region
    $region21: #{conv3d_transpose_bn_relu.3} parent=5 // pred_check
      %p141 = pneg %p140
    $region22: #{conv3d_transpose_bn_relu.3} parent=5 // pred_check_branch
      %143 = sbr.rel (%p141) target = $region24
    $region23: #{conv3d_transpose_bn_relu.3} parent=5 // pred_region
      // Predicated region
      $region25: #{conv3d_transpose_bn_relu.3} parent=23 // pred_check
        %p144 = pneg %p43
      $region26: #{conv3d_transpose_bn_relu.3} parent=23 // pred_check_branch
        %146 = sbr.rel (%p144) target = $region28
      $region27: #{conv3d_transpose_bn_relu.3} parent=23 // pred_region
        %s147 = smul.u32 2, %s17
        %p148 = scmp.lt.s32.totalorder %s16, 7
        %s149 = scalar_select %p148, %s16, 7
        %p150 = scmp.lt.s32.totalorder %s147, 1
        %s151 = scalar_select %p150, %s147, 1
        %s152 = smul.addr %s149, 2
        %s153 = sadd.s32 %s151, %s152
        %s154 = smul.addr %s153, 8
        %s155 = scalar_lea.vmem %s0, %s154
        %s156 = smul.u32 2, %s17
      $region28: #{conv3d_transpose_bn_relu.3} parent=23 // pred_fallthru
        _
    $region24: #{conv3d_transpose_bn_relu.3} parent=5 // pred_fallthru
      _
    %p157 = scmp.le.s32.totalorder 1, %s9
    %p158 = scmp.lt.s32.totalorder %s9, 9
    %p159 = pnand %p157, %p158
    %p160 = pneg %p159
    // Predicated region
    $region29: #{conv3d_transpose_bn_relu.3} parent=5 // pred_check
      _
    $region30: #{conv3d_transpose_bn_relu.3} parent=5 // pred_check_branch
      %162 = sbr.rel (%p159) target = $region32
    $region31: #{conv3d_transpose_bn_relu.3} parent=5 // pred_region
      %s163 = ssub.s32 %s9, 1
      %s164 = smul.u32 2, %s19
      %p165 = scmp.lt.s32.totalorder %s18, 7
      %s166 = scalar_select %p165, %s18, 7
      %p167 = scmp.lt.s32.totalorder %s164, 1
      %s168 = scalar_select %p167, %s164, 1
      %s169 = smul.addr %s166, 2
      %s170 = sadd.s32 %s168, %s169
      %s171 = smul.addr %s170, 8
      %s172 = scalar_lea.vmem %s0, %s171
      %p173 = pneg %p49
      %p174 = pneg %p46
      %p175 = pneg %p70
      %p176 = pneg %p67
      %p177 = pneg %p91
      %p178 = pneg %p88
      %p179 = pneg %p119
      %p180 = pneg %p116
      %s181 = smul.u32 2, %s19
      %p182 = scmp.lt.s32.totalorder %s18, 7
      %s183 = scalar_select %p182, %s18, 7
      %p184 = scmp.lt.s32.totalorder %s181, 1
      %s185 = scalar_select %p184, %s181, 1
      %s186 = smul.addr %s183, 2
      %s187 = sadd.s32 %s185, %s186
      %s188 = smul.addr %s187, 8
      %s189 = scalar_lea.vmem %s3, %s188
      %s190 = smul.u32 2, %s19
      %p191 = scmp.lt.s32.totalorder %s18, 7
      %s192 = scalar_select %p191, %s18, 7
      %p193 = scmp.lt.s32.totalorder %s190, 1
      %s194 = scalar_select %p193, %s190, 1
      %s195 = smul.addr %s192, 2
      %s196 = sadd.s32 %s194, %s195
      %s197 = smul.addr %s196, 8
      %s198 = scalar_lea.vmem %s0, %s197
      %s199 = smul.u32 2, %s19
      %s200 = smul.u32 2, %s19
      %p201 = scmp.lt.s32.totalorder %s18, 7
      %s202 = scalar_select %p201, %s18, 7
      %p203 = scmp.lt.s32.totalorder %s200, 1
      %s204 = scalar_select %p203, %s200, 1
      %s205 = smul.addr %s202, 2
      %s206 = sadd.s32 %s204, %s205
      %s207 = smul.addr %s206, 8
      %s208 = scalar_lea.vmem %s3, %s207
      %s209 = smul.u32 2, %s19
      %v210 = vld [vmem:[%s198] sm:$0xff]
      %v211 = vld [vmem:[%s198 + $0x8] sm:$0xff]
      %v212 = vld [vmem:[%s1] sm:$0xff]
      %214 = vset.pattern.permute.xlu0 0
      %215 = vperm.xlu0 %214, %v212
      %v216 = vpop.permute.xlu0 %215
      %v218 = vmul.f32 %v210, %v216
      %v219 = vmul.f32 %v211, %v216
      %v220 = vld [vmem:[%s2] sm:$0xff]
      %222 = vset.pattern.permute.xlu0 0
      %223 = vperm.xlu0 %222, %v220
      %v224 = vpop.permute.xlu0 %223
      %v226 = vadd.f32 %v218, %v224
      %v227 = vadd.f32 %v219, %v224
      %v228 = vmax.f32 %v226, 0.0
      %v229 = vmax.f32 %v227, 0.0
      %230 = vst [vmem:[%s208] sm:$0xff] %v228
      %231 = vst [vmem:[%s208 + $0x8] sm:$0xff] %v229
      %s232 = smul.u32 2, %s19
      %p233 = scmp.lt.s32.totalorder %s18, 7
      %s234 = scalar_select %p233, %s18, 7
      %p235 = scmp.lt.s32.totalorder %s232, 1
      %s236 = scalar_select %p235, %s232, 1
      %s237 = smul.addr %s234, 2
      %s238 = sadd.s32 %s236, %s237
      %s239 = smul.addr %s238, 8
      %s240 = scalar_lea.vmem %s3, %s239
      // Predicated region
      $region33: #{conv3d_transpose_bn_relu.3} parent=31 // pred_check
        %p241 = pneg %p116
      $region34: #{conv3d_transpose_bn_relu.3} parent=31 // pred_check_branch
        %243 = sbr.rel (%p241) target = $region36
      $region35: #{conv3d_transpose_bn_relu.3} parent=31 // pred_region
        %s244 = smul.u32 2, %s19
      $region36: #{conv3d_transpose_bn_relu.3} parent=31 // pred_fallthru
        _
    $region32: #{conv3d_transpose_bn_relu.3} parent=5 // pred_fallthru
      _
    %p245 = scmp.le.s32.totalorder 2, %s9
    // Predicated region
    $region37: #{conv3d_transpose_bn_relu.3} parent=5 // pred_check
      %p246 = pneg %p245
    $region38: #{conv3d_transpose_bn_relu.3} parent=5 // pred_check_branch
      %248 = sbr.rel (%p246) target = $region40
    $region39: #{conv3d_transpose_bn_relu.3} parent=5 // pred_region
      %s249 = ssub.s32 %s9, 2
      // Predicated region
      $region41: #{conv3d_transpose_bn_relu.3} parent=39 // pred_check
        %p250 = pneg %p122
      $region42: #{conv3d_transpose_bn_relu.3} parent=39 // pred_check_branch
        %252 = sbr.rel (%p250) target = $region44
      $region43: #{conv3d_transpose_bn_relu.3} parent=39 // pred_region
        %s253 = smul.u32 2, %s21
        %p254 = scmp.lt.s32.totalorder %s20, 7
        %s255 = scalar_select %p254, %s20, 7
        %p256 = scmp.lt.s32.totalorder %s253, 1
        %s257 = scalar_select %p256, %s253, 1
        %s258 = smul.addr %s255, 2
        %s259 = sadd.s32 %s257, %s258
        %s260 = smul.addr %s259, 8
        %s261 = scalar_lea.vmem %s3, %s260
      $region44: #{conv3d_transpose_bn_relu.3} parent=39 // pred_fallthru
        _
    $region40: #{conv3d_transpose_bn_relu.3} parent=5 // pred_fallthru
      _
  $region6: #{conv3d_transpose_bn_relu.3} parent=0 // loop_footer
    %s13 = sadd.s32 1, %s9
  $region7: #{conv3d_transpose_bn_relu.3} parent=0 // loop_footer_branch
    %8 = sbr.rel target = $region3
  $region8: #{conv3d_transpose_bn_relu.3} parent=0 // loop_exit
    _

</llo_original>
